<compile_context>
chip_gen: v7x
topology: tpu7x:2x2x1
jax: 0.10.0
libtpu: 0.0.40
codegen_flags: <defaults>
</compile_context>

<pallas_src>
import functools

import jax
import jax.numpy as jnp
from jax.experimental import pallas as pl
from jax.experimental.pallas import tpu as pltpu

LANE = 128          # TPU lane width: keep the output (class) dim lane-dense
NEG_BIG = -1.0e30   # finite "minus infinity" for masking padded class lanes


def _linear_logsoftmax_kernel(x_ref, wt_ref, o_ref, *, n_class):
    # x_ref: (TN, F) batch tile, wt_ref: (F, C_pad) resident weight, o_ref: (TN, C_pad)
    logits = jnp.dot(x_ref[...], wt_ref[...], preferred_element_type=jnp.float32)

    # Mask padded class lanes so they don't contaminate the softmax normalization.
    col = jax.lax.broadcasted_iota(jnp.int32, logits.shape, 1)
    logits = jnp.where(col < n_class, logits, NEG_BIG)

    # Numerically-stable log_softmax over the last (lane) dim.
    m = jnp.max(logits, axis=-1, keepdims=True)
    shifted = logits - m
    lse = jnp.log(jnp.sum(jnp.exp(shifted), axis=-1, keepdims=True))
    o_ref[...] = (shifted - lse).astype(o_ref.dtype)


def prepare_weight(weight, lane=LANE):
    """One-time model-load prep (NOT in the forward hot path):
    (C, F) PyTorch layout -> transposed (F, C_pad) with the class dim zero-padded
    to a multiple of the 128-lane width for lane-dense stores."""
    c, f = weight.shape
    c_pad = ((c + lane - 1) // lane) * lane
    wt = jnp.zeros((f, c_pad), weight.dtype)
    wt = wt.at[:, :c].set(weight.T)
    return wt


def linear_model_forward(x, wt_padded, n_class, *, tn_max=512):
    """x: (N, F) float32; wt_padded: (F, C_pad) from prepare_weight.
    Returns log-probabilities of shape (N, n_class)."""
    n, f = x.shape
    f2, c_pad = wt_padded.shape
    assert f == f2 and c_pad % LANE == 0 and n_class <= c_pad

    # Batch tile: multiple of 8 sublanes, capped at tn_max (sized against v7x 64 MiB VMEM:
    # x tile 512*784*4B*2buf + out 512*128*4B*2buf + W 784*128*4B*2buf ~= 4.5 MB).
    tn = min(tn_max, max(8, ((n + 7) // 8) * 8))
    n_pad = ((n + tn - 1) // tn) * tn
    if n_pad != n:
        x = jnp.pad(x, ((0, n_pad - n), (0, 0)))  # zero rows -> valid log_softmax, sliced off below

    grid = (n_pad // tn,)

    out = pl.pallas_call(
        functools.partial(_linear_logsoftmax_kernel, n_class=n_class),
        out_shape=jax.ShapeDtypeStruct((n_pad, c_pad), jnp.float32),
        grid=grid,
        in_specs=[
            pl.BlockSpec((tn, f), lambda i: (i, 0)),     # stream batch tiles (pipelined)
            pl.BlockSpec((f, c_pad), lambda i: (0, 0)),  # weight stays VMEM-resident
        ],
        out_specs=pl.BlockSpec((tn, c_pad), lambda i: (i, 0)),
        compiler_params=pltpu.CompilerParams(
            dimension_semantics=("parallel",),  # shard batch tiles across TCs on v7x
        ),
    )(x, wt_padded)

    return out[:n, :n_class]


def reference_forward(x, weight):
    logits = x @ weight.T
    return jax.nn.log_softmax(logits, axis=-1)


if __name__ == "__main__":
    n_class = 10
    n_feature = 784  # MNIST 28x28 flattened
    batch = 8

    key = jax.random.PRNGKey(0)
    kx, kw = jax.random.split(key)

    # nn.Linear(dim_input, n_class, bias=False): weight (n_class, dim_input),
    # uniform(-1/sqrt(F), 1/sqrt(F)) like PyTorch default init.
    bound = 1.0 / (n_feature ** 0.5)
    weight = jax.random.uniform(
        kw, (n_class, n_feature), dtype=jnp.float32, minval=-bound, maxval=bound
    )

    # Synthetic input, scaled to [0, 1] like X_test / X_test.max().
    x = jax.random.uniform(kx, (batch, n_feature), dtype=jnp.float32)
    x = x / jnp.max(x)

    wt_padded = prepare_weight(weight)  # one-time, outside the forward hot path
    out = linear_model_forward(x, wt_padded, n_class)
    out = jax.block_until_ready(out)

    ref = reference_forward(x, weight)
    assert out.shape == (batch, n_class)
    assert jnp.allclose(out, ref, atol=1e-4, rtol=1e-4), "mismatch vs reference"

    print("KERNEL_OK")
</pallas_src>

<mosaic_0001>
module attributes {stable_mosaic.version = 11 : i64} {
  func.func @_linear_logsoftmax_kernel(%arg0: i32, %arg1: memref<8x784xf32, #tpu.memory_space<vmem>>, %arg2: memref<784x128xf32, #tpu.memory_space<vmem>>, %arg3: memref<8x128xf32, #tpu.memory_space<vmem>>) attributes {dimension_semantics = [#tpu.dimension_semantics<parallel>], iteration_bounds = array<i64: 1>, scalar_prefetch = 0 : i64, scratch_operands = 0 : i64, tpu.core_type = #tpu.core_type<tc>, window_params = [{transform_indices = @transform_0, window_bounds = array<i64: 8, 784>}, {pipeline_mode = #tpu.pipeline_mode<synchronous>, transform_indices = @transform_1, window_bounds = array<i64: 784, 128>}, {transform_indices = @transform_2, window_bounds = array<i64: 8, 128>}]} {
    %c0 = arith.constant 0 : index
    %c0_0 = arith.constant 0 : index
    %0 = vector.load %arg1[%c0, %c0_0] : memref<8x784xf32, #tpu.memory_space<vmem>>, vector<8x784xf32>
    %c0_1 = arith.constant 0 : index
    %c0_2 = arith.constant 0 : index
    %1 = vector.load %arg2[%c0_1, %c0_2] : memref<784x128xf32, #tpu.memory_space<vmem>>, vector<784x128xf32>
    %cst = arith.constant dense<0.000000e+00> : vector<8x128xf32>
    %2 = tpu.matmul %0, %1, %cst {dimension_numbers = #tpu.dot_dimension_numbers<[1], [0], [0], [1], [0, 0, 1, 1], [], []>} : vector<8x784xf32>, vector<784x128xf32>, vector<8x128xf32> -> vector<8x128xf32>
    %3 = tpu.iota {dimensions = array<i32: 1>} : vector<8x128xi32>
    %c10_i32 = arith.constant 10 : i32
    %4 = vector.broadcast %c10_i32 : i32 to vector<8x128xi32>
    %5 = arith.cmpi slt, %3, %4 : vector<8x128xi32>
    %cst_3 = arith.constant -1.000000e+30 : f32
    %6 = vector.broadcast %cst_3 : f32 to vector<8x128xf32>
    %7 = arith.select %5, %2, %6 : vector<8x128xi1>, vector<8x128xf32>
    %cst_4 = arith.constant dense<0xFF800000> : vector<8xf32>
    %8 = vector.multi_reduction <maximumf>, %7, %cst_4 [1] : vector<8x128xf32> to vector<8xf32>
    %9 = vector.shape_cast %8 : vector<8xf32> to vector<8x1xf32>
    %10 = vector.broadcast %9 : vector<8x1xf32> to vector<8x128xf32>
    %11 = arith.subf %7, %10 : vector<8x128xf32>
    %12 = math.exp %11 : vector<8x128xf32>
    %cst_5 = arith.constant dense<0.000000e+00> : vector<8xf32>
    %13 = vector.multi_reduction <add>, %12, %cst_5 [1] : vector<8x128xf32> to vector<8xf32>
    %14 = vector.shape_cast %13 : vector<8xf32> to vector<8x1xf32>
    %15 = math.log %14 : vector<8x1xf32>
    %16 = vector.broadcast %15 : vector<8x1xf32> to vector<8x128xf32>
    %17 = arith.subf %11, %16 : vector<8x128xf32>
    %c0_6 = arith.constant 0 : index
    %c0_7 = arith.constant 0 : index
    %18 = vector.load %arg3[%c0_6, %c0_7] : memref<8x128xf32, #tpu.memory_space<vmem>>, vector<8x128xf32>
    tpu.vector_store %arg3[%c0_6, %c0_7], %17 {strides = array<i32>} : memref<8x128xf32, #tpu.memory_space<vmem>>, vector<8x128xf32>,
    return
  }
  func.func @transform_0(%arg0: i32) -> (i32, i32) {
    %c0_i32 = arith.constant 0 : i32
    %c0_i32_0 = arith.constant 0 : i32
    return %arg0, %c0_i32 : i32, i32
  }
  func.func @transform_1(%arg0: i32) -> (i32, i32) {
    %c0_i32 = arith.constant 0 : i32
    %c0_i32_0 = arith.constant 0 : i32
    %c0_i32_1 = arith.constant 0 : i32
    return %c0_i32, %c0_i32_0 : i32, i32
  }
  func.func @transform_2(%arg0: i32) -> (i32, i32) {
    %c0_i32 = arith.constant 0 : i32
    %c0_i32_0 = arith.constant 0 : i32
    return %arg0, %c0_i32 : i32, i32
  }
}

</mosaic_0001>

<llo_original>
// kernel: tpu_custom_call.1
$region0: #{tpu_custom_call.1}
  #allocation0 [shape = 'u32[]', space=smem, size = 0x4, offset = 0x4, fixed_abs, tag = 'smem constant byte address 0x4 - core index']
  #allocation1 [shape = 'u32[144,128]{1,0:T(1,128)}', space=vmem, size = 0x12000, scoped, tag = 'internal scratch']
  %s0 = inlined_call_operand.hbm [shape: f32[8,784], index: 0, kind: input, shape index: {}]
  %s1 = inlined_call_operand.hbm [shape: f32[784,128], index: 1, kind: input, shape index: {}]
  %s2 = inlined_call_operand.hbm [shape: f32[8,128], index: 2, kind: output, shape index: {}]
  %s3 = sld [smem:[#allocation0]]
  $region26: #{tpu_custom_call.1} parent=0
    _
  %s5 = ssub.s32 1, %s3
  %s6 = scalar_select 0, %s5, %s3
  $region1: #{tpu_custom_call.1} parent=0
    #allocation2 [shape = 'u8[28672]{0}', space=vmem, size = 0x7000, scoped, tag = 'input window, operand 0, single buffered']
    #allocation3 [shape = 's32[1]{0}', space=sflag, size = 0x4, scoped, tag = 'scoped memory for tpu_custom_call.1']
    #allocation4 [shape = 's32[1]{0}', space=sflag, size = 0x4, scoped, tag = 'scoped memory for tpu_custom_call.1']
    #allocation5 [shape = 'u8[401408]{0}', space=vmem, size = 0x62000, scoped, tag = 'input window, operand 1, single buffered']
    #allocation6 [shape = 's32[1]{0}', space=sflag, size = 0x4, scoped, tag = 'scoped memory for tpu_custom_call.1']
    #allocation7 [shape = 'u8[4096]{0}', space=vmem, size = 0x1000, scoped, tag = 'output window, operand 0, single buffered']
    %7 = vsyncpa [#allocation3], 0
    %8 = vsyncpa [#allocation6], 0
    %9 = vsyncpa [#allocation4], 0
    // Predicated region
    $region2: #{tpu_custom_call.1} parent=1 // pred_check
      _
    $region3: #{tpu_custom_call.1} parent=1 // pred_check_branch
      %11 = sbr.rel (0) target = $region5
    $region4: #{tpu_custom_call.1} parent=1 // pred_region
      %s13 = ssub.s32 896, 896
      %14 = vsyncadd [#allocation3], %s13
      %s16 = sshll.u32 [#allocation2], 4
      %s17 = int_to_ptr.vmem [resolvable:$true] %s16
      %19 = dma.hbm_to_vmem [thread:$0]  %s0, 896, %s17, [#allocation3]
    $region5: #{tpu_custom_call.1} parent=1 // pred_fallthru
      _
    // Predicated region
    $region6: #{tpu_custom_call.1} parent=1 // pred_check
      _
    $region7: #{tpu_custom_call.1} parent=1 // pred_check_branch
      %21 = sbr.rel (0) target = $region9
    $region8: #{tpu_custom_call.1} parent=1 // pred_region
      %s23 = ssub.s32 12544, 12544
      %24 = vsyncadd [#allocation6], %s23
      %s25 = sshll.u32 [#allocation5], 4
      %s26 = int_to_ptr.vmem [resolvable:$true] %s25
      %31 = dma.hbm_to_vmem [thread:$0]  %s1, 12544, %s26, [#allocation6], 128, 128, 8
    $region9: #{tpu_custom_call.1} parent=1 // pred_fallthru
      _
    // Predicated region
    $region10: #{tpu_custom_call.1} parent=1 // pred_check
      _
    $region11: #{tpu_custom_call.1} parent=1 // pred_check_branch
      %33 = sbr.rel (0) target = $region13
    $region12: #{tpu_custom_call.1} parent=1 // pred_region
      %34 = dma.done [#allocation3], 896
    $region13: #{tpu_custom_call.1} parent=1 // pred_fallthru
      _
    // Predicated region
    $region14: #{tpu_custom_call.1} parent=1 // pred_check
      _
    $region15: #{tpu_custom_call.1} parent=1 // pred_check_branch
      %36 = sbr.rel (0) target = $region17
    $region16: #{tpu_custom_call.1} parent=1 // pred_region
      %37 = dma.done [#allocation6], 12544
    $region17: #{tpu_custom_call.1} parent=1 // pred_fallthru
      _
    %v38 = vld [vmem:[#allocation2] sm:$0xff]
    %v39 = vld [vmem:[#allocation2 + $0x8] sm:$0xff]
    %v40 = vld [vmem:[#allocation2 + $0x10] sm:$0xff]
    %v41 = vld [vmem:[#allocation2 + $0x18] sm:$0xff]
    %v42 = vld [vmem:[#allocation2 + $0x20] sm:$0xff]
    %v43 = vld [vmem:[#allocation2 + $0x28] sm:$0xff]
    %v44 = vld [vmem:[#allocation2 + $0x30] sm:$0xff]
    %v45 = vld [vmem:[#allocation5] sm:$0xff]
    %v46 = vld [vmem:[#allocation5 + $0x8] sm:$0xff]
    %v47 = vld [vmem:[#allocation5 + $0x10] sm:$0xff]
    %v48 = vld [vmem:[#allocation5 + $0x18] sm:$0xff]
    %v49 = vld [vmem:[#allocation5 + $0x20] sm:$0xff]
    %v50 = vld [vmem:[#allocation5 + $0x28] sm:$0xff]
    %v51 = vld [vmem:[#allocation5 + $0x30] sm:$0xff]
    %v52 = vld [vmem:[#allocation5 + $0x38] sm:$0xff]
    %v53 = vld [vmem:[#allocation5 + $0x40] sm:$0xff]
    %v54 = vld [vmem:[#allocation5 + $0x48] sm:$0xff]
    %v55 = vld [vmem:[#allocation5 + $0x50] sm:$0xff]
    %v56 = vld [vmem:[#allocation5 + $0x58] sm:$0xff]
    %v57 = vld [vmem:[#allocation5 + $0x60] sm:$0xff]
    %v58 = vld [vmem:[#allocation5 + $0x68] sm:$0xff]
    %v59 = vld [vmem:[#allocation5 + $0x70] sm:$0xff]
    %v60 = vld [vmem:[#allocation5 + $0x78] sm:$0xff]
    %v61 = vld [vmem:[#allocation5 + $0x80] sm:$0xff]
    %v62 = vld [vmem:[#allocation5 + $0x88] sm:$0xff]
    %v63 = vld [vmem:[#allocation5 + $0x90] sm:$0xff]
    %v64 = vld [vmem:[#allocation5 + $0x98] sm:$0xff]
    %v65 = vld [vmem:[#allocation5 + $0xa0] sm:$0xff]
    %v66 = vld [vmem:[#allocation5 + $0xa8] sm:$0xff]
    %v67 = vld [vmem:[#allocation5 + $0xb0] sm:$0xff]
    %v68 = vld [vmem:[#allocation5 + $0xb8] sm:$0xff]
    %v69 = vld [vmem:[#allocation5 + $0xc0] sm:$0xff]
    %v70 = vld [vmem:[#allocation5 + $0xc8] sm:$0xff]
    %v71 = vld [vmem:[#allocation5 + $0xd0] sm:$0xff]
    %v72 = vld [vmem:[#allocation5 + $0xd8] sm:$0xff]
    %v73 = vld [vmem:[#allocation5 + $0xe0] sm:$0xff]
    %v74 = vld [vmem:[#allocation5 + $0xe8] sm:$0xff]
    %v75 = vld [vmem:[#allocation5 + $0xf0] sm:$0xff]
    %v76 = vld [vmem:[#allocation5 + $0xf8] sm:$0xff]
    %v77 = vld [vmem:[#allocation5 + $0x100] sm:$0xff]
    %v78 = vld [vmem:[#allocation5 + $0x108] sm:$0xff]
    %v79 = vld [vmem:[#allocation5 + $0x110] sm:$0xff]
    %v80 = vld [vmem:[#allocation5 + $0x118] sm:$0xff]
    %v81 = vld [vmem:[#allocation5 + $0x120] sm:$0xff]
    %v82 = vld [vmem:[#allocation5 + $0x128] sm:$0xff]
    %v83 = vld [vmem:[#allocation5 + $0x130] sm:$0xff]
    %v84 = vld [vmem:[#allocation5 + $0x138] sm:$0xff]
    %v85 = vld [vmem:[#allocation5 + $0x140] sm:$0xff]
    %v86 = vld [vmem:[#allocation5 + $0x148] sm:$0xff]
    %v87 = vld [vmem:[#allocation5 + $0x150] sm:$0xff]
    %v88 = vld [vmem:[#allocation5 + $0x158] sm:$0xff]
    %v89 = vld [vmem:[#allocation5 + $0x160] sm:$0xff]
    %v90 = vld [vmem:[#allocation5 + $0x168] sm:$0xff]
    %v91 = vld [vmem:[#allocation5 + $0x170] sm:$0xff]
    %v92 = vld [vmem:[#allocation5 + $0x178] sm:$0xff]
    %v93 = vld [vmem:[#allocation5 + $0x180] sm:$0xff]
    %v94 = vld [vmem:[#allocation5 + $0x188] sm:$0xff]
    %v95 = vld [vmem:[#allocation5 + $0x190] sm:$0xff]
    %v96 = vld [vmem:[#allocation5 + $0x198] sm:$0xff]
    %v97 = vld [vmem:[#allocation5 + $0x1a0] sm:$0xff]
    %v98 = vld [vmem:[#allocation5 + $0x1a8] sm:$0xff]
    %v99 = vld [vmem:[#allocation5 + $0x1b0] sm:$0xff]
    %v100 = vld [vmem:[#allocation5 + $0x1b8] sm:$0xff]
    %v101 = vld [vmem:[#allocation5 + $0x1c0] sm:$0xff]
    %v102 = vld [vmem:[#allocation5 + $0x1c8] sm:$0xff]
    %v103 = vld [vmem:[#allocation5 + $0x1d0] sm:$0xff]
    %v104 = vld [vmem:[#allocation5 + $0x1d8] sm:$0xff]
    %v105 = vld [vmem:[#allocation5 + $0x1e0] sm:$0xff]
    %v106 = vld [vmem:[#allocation5 + $0x1e8] sm:$0xff]
    %v107 = vld [vmem:[#allocation5 + $0x1f0] sm:$0xff]
    %v108 = vld [vmem:[#allocation5 + $0x1f8] sm:$0xff]
    %v109 = vld [vmem:[#allocation5 + $0x200] sm:$0xff]
    %v110 = vld [vmem:[#allocation5 + $0x208] sm:$0xff]
    %v111 = vld [vmem:[#allocation5 + $0x210] sm:$0xff]
    %v112 = vld [vmem:[#allocation5 + $0x218] sm:$0xff]
    %v113 = vld [vmem:[#allocation5 + $0x220] sm:$0xff]
    %v114 = vld [vmem:[#allocation5 + $0x228] sm:$0xff]
    %v115 = vld [vmem:[#allocation5 + $0x230] sm:$0xff]
    %v116 = vld [vmem:[#allocation5 + $0x238] sm:$0xff]
    %v117 = vld [vmem:[#allocation5 + $0x240] sm:$0xff]
    %v118 = vld [vmem:[#allocation5 + $0x248] sm:$0xff]
    %v119 = vld [vmem:[#allocation5 + $0x250] sm:$0xff]
    %v120 = vld [vmem:[#allocation5 + $0x258] sm:$0xff]
    %v121 = vld [vmem:[#allocation5 + $0x260] sm:$0xff]
    %v122 = vld [vmem:[#allocation5 + $0x268] sm:$0xff]
    %v123 = vld [vmem:[#allocation5 + $0x270] sm:$0xff]
    %v124 = vld [vmem:[#allocation5 + $0x278] sm:$0xff]
    %v125 = vld [vmem:[#allocation5 + $0x280] sm:$0xff]
    %v126 = vld [vmem:[#allocation5 + $0x288] sm:$0xff]
    %v127 = vld [vmem:[#allocation5 + $0x290] sm:$0xff]
    %v128 = vld [vmem:[#allocation5 + $0x298] sm:$0xff]
    %v129 = vld [vmem:[#allocation5 + $0x2a0] sm:$0xff]
    %v130 = vld [vmem:[#allocation5 + $0x2a8] sm:$0xff]
    %v131 = vld [vmem:[#allocation5 + $0x2b0] sm:$0xff]
    %v132 = vld [vmem:[#allocation5 + $0x2b8] sm:$0xff]
    %v133 = vld [vmem:[#allocation5 + $0x2c0] sm:$0xff]
    %v134 = vld [vmem:[#allocation5 + $0x2c8] sm:$0xff]
    %v135 = vld [vmem:[#allocation5 + $0x2d0] sm:$0xff]
    %v136 = vld [vmem:[#allocation5 + $0x2d8] sm:$0xff]
    %v137 = vld [vmem:[#allocation5 + $0x2e0] sm:$0xff]
    %v138 = vld [vmem:[#allocation5 + $0x2e8] sm:$0xff]
    %v139 = vld [vmem:[#allocation5 + $0x2f0] sm:$0xff]
    %v140 = vld [vmem:[#allocation5 + $0x2f8] sm:$0xff]
    %v141 = vld [vmem:[#allocation5 + $0x300] sm:$0xff]
    %v142 = vld [vmem:[#allocation5 + $0x308] sm:$0xff]
    %vm143 = vcmask 130048
    %v145 = vsel %vm143, %v44, 0
    %147 = vmatprep.subr.mxu0 0.0
    %148 = vmatpush1.msra.mxu0 %v45
    %149 = vmatprep.subr.mxu0 0.0
    %150 = vmatpush1.msra.mxu0 %v46
    %151 = vmatprep.subr.mxu0 0.0
    %152 = vmatpush1.msra.mxu0 %v47
    %153 = vmatprep.subr.mxu0 0.0
    %154 = vmatpush1.msra.mxu0 %v48
    %155 = vmatprep.subr.mxu0 0.0
    %156 = vmatpush1.msra.mxu0 %v49
    %157 = vmatprep.subr.mxu0 0.0
    %158 = vmatpush1.msra.mxu0 %v50
    %159 = vmatprep.subr.mxu0 0.0
    %160 = vmatpush1.msra.mxu0 %v51
    %161 = vmatprep.subr.mxu0 0.0
    %162 = vmatpush1.msra.mxu0 %v52
    %163 = vmatprep.subr.mxu0 0.0
    %164 = vmatpush1.msra.mxu0 %v53
    %165 = vmatprep.subr.mxu0 0.0
    %166 = vmatpush1.msra.mxu0 %v54
    %167 = vmatprep.subr.mxu0 0.0
    %168 = vmatpush1.msra.mxu0 %v55
    %169 = vmatprep.subr.mxu0 0.0
    %170 = vmatpush1.msra.mxu0 %v56
    %171 = vmatprep.subr.mxu0 0.0
    %172 = vmatpush1.msra.mxu0 %v57
    %173 = vmatprep.subr.mxu0 0.0
    %174 = vmatpush1.msra.mxu0 %v58
    %175 = vmatprep.subr.mxu0 0.0
    %176 = vmatpush1.msra.mxu0 %v59
    %177 = vmatprep.subr.mxu0 0.0
    %178 = vmatpush1.msra.mxu0 %v60
    %179 = vmatprep.subr.mxu0 0.0
    %180 = vmatpush1.msra.mxu0 %v61
    %181 = vmatprep.subr.mxu0 0.0
    %182 = vmatpush1.msra.mxu0 %v62
    %183 = vmatprep.subr.mxu0 0.0
    %184 = vmatpush1.msra.mxu0 %v63
    %185 = vmatprep.subr.mxu0 0.0
    %186 = vmatpush1.msra.mxu0 %v64
    %187 = vmatprep.subr.mxu0 0.0
    %188 = vmatpush1.msra.mxu0 %v65
    %189 = vmatprep.subr.mxu0 0.0
    %190 = vmatpush1.msra.mxu0 %v66
    %191 = vmatprep.subr.mxu0 0.0
    %192 = vmatpush1.msra.mxu0 %v67
    %193 = vmatprep.subr.mxu0 0.0
    %194 = vmatpush1.msra.mxu0 %v68
    %195 = vmatprep.subr.mxu0 0.0
    %196 = vmatpush1.msra.mxu0 %v69
    %197 = vmatprep.subr.mxu0 0.0
    %198 = vmatpush1.msra.mxu0 %v70
    %199 = vmatprep.subr.mxu0 0.0
    %200 = vmatpush1.msra.mxu0 %v71
    %201 = vmatprep.subr.mxu0 0.0
    %202 = vmatpush1.msra.mxu0 %v72
    %203 = vmatprep.subr.mxu0 0.0
    %204 = vmatpush1.msra.mxu0 %v73
    %205 = vmatprep.subr.mxu0 0.0
    %206 = vmatpush1.msra.mxu0 %v74
    %207 = vmatprep.subr.mxu0 0.0
    %208 = vmatpush1.msra.mxu0 %v75
    %209 = vmatprep.subr.mxu0 0.0
    %210 = vmatpush1.msra.mxu0 %v76
    %211 = vmatprep.mubr.f32.mxu0 %v39
    %212 = vmatmul.mubr.f32.gmra.mrb[0].mxu0 %v38
    %v213 = vpop.f32.mrb[0].mxu0
    %v214 = vadd.f32 0.0, %v213
    %v215 = vpop.f32.mrb[0].mxu0
    %216 = vdwg.mxu0
    %217 = vmatprep.subr.mxu0 0.0
    %218 = vmatpush1.msra.mxu0 %v77
    %219 = vmatprep.subr.mxu0 0.0
    %220 = vmatpush1.msra.mxu0 %v78
    %221 = vmatprep.subr.mxu0 0.0
    %222 = vmatpush1.msra.mxu0 %v79
    %223 = vmatprep.subr.mxu0 0.0
    %224 = vmatpush1.msra.mxu0 %v80
    %225 = vmatprep.subr.mxu0 0.0
    %226 = vmatpush1.msra.mxu0 %v81
    %227 = vmatprep.subr.mxu0 0.0
    %228 = vmatpush1.msra.mxu0 %v82
    %229 = vmatprep.subr.mxu0 0.0
    %230 = vmatpush1.msra.mxu0 %v83
    %231 = vmatprep.subr.mxu0 0.0
    %232 = vmatpush1.msra.mxu0 %v84
    %233 = vmatprep.subr.mxu0 0.0
    %234 = vmatpush1.msra.mxu0 %v85
    %235 = vmatprep.subr.mxu0 0.0
    %236 = vmatpush1.msra.mxu0 %v86
    %237 = vmatprep.subr.mxu0 0.0
    %238 = vmatpush1.msra.mxu0 %v87
    %239 = vmatprep.subr.mxu0 0.0
    %240 = vmatpush1.msra.mxu0 %v88
    %241 = vmatprep.subr.mxu0 0.0
    %242 = vmatpush1.msra.mxu0 %v89
    %243 = vmatprep.subr.mxu0 0.0
    %244 = vmatpush1.msra.mxu0 %v90
    %245 = vmatprep.subr.mxu0 0.0
    %246 = vmatpush1.msra.mxu0 %v91
    %247 = vmatprep.subr.mxu0 0.0
    %248 = vmatpush1.msra.mxu0 %v92
    %249 = vmatprep.subr.mxu0 0.0
    %250 = vmatpush1.msra.mxu0 %v93
    %251 = vmatprep.subr.mxu0 0.0
    %252 = vmatpush1.msra.mxu0 %v94
    %253 = vmatprep.subr.mxu0 0.0
    %254 = vmatpush1.msra.mxu0 %v95
    %255 = vmatprep.subr.mxu0 0.0
    %256 = vmatpush1.msra.mxu0 %v96
    %257 = vmatprep.subr.mxu0 0.0
    %258 = vmatpush1.msra.mxu0 %v97
    %259 = vmatprep.subr.mxu0 0.0
    %260 = vmatpush1.msra.mxu0 %v98
    %261 = vmatprep.subr.mxu0 0.0
    %262 = vmatpush1.msra.mxu0 %v99
    %263 = vmatprep.subr.mxu0 0.0
    %264 = vmatpush1.msra.mxu0 %v100
    %265 = vmatprep.subr.mxu0 0.0
    %266 = vmatpush1.msra.mxu0 %v101
    %267 = vmatprep.subr.mxu0 0.0
    %268 = vmatpush1.msra.mxu0 %v102
    %269 = vmatprep.subr.mxu0 0.0
    %270 = vmatpush1.msra.mxu0 %v103
    %271 = vmatprep.subr.mxu0 0.0
    %272 = vmatpush1.msra.mxu0 %v104
    %273 = vmatprep.subr.mxu0 0.0
    %274 = vmatpush1.msra.mxu0 %v105
    %275 = vmatprep.subr.mxu0 0.0
    %276 = vmatpush1.msra.mxu0 %v106
    %277 = vmatprep.subr.mxu0 0.0
    %278 = vmatpush1.msra.mxu0 %v107
    %279 = vmatprep.subr.mxu0 0.0
    %280 = vmatpush1.msra.mxu0 %v108
    %281 = vmatprep.mubr.f32.mxu0 %v41
    %282 = vmatmul.mubr.f32.gmra.mrb[0].mxu0 %v40
    %v283 = vpop.f32.mrb[0].mxu0
    %v284 = vadd.f32 %v214, %v283
    %v285 = vpop.f32.mrb[0].mxu0
    %286 = vdwg.mxu0
    %287 = vmatprep.subr.mxu0 0.0
    %288 = vmatpush1.msra.mxu0 %v109
    %289 = vmatprep.subr.mxu0 0.0
    %290 = vmatpush1.msra.mxu0 %v110
    %291 = vmatprep.subr.mxu0 0.0
    %292 = vmatpush1.msra.mxu0 %v111
    %293 = vmatprep.subr.mxu0 0.0
    %294 = vmatpush1.msra.mxu0 %v112
    %295 = vmatprep.subr.mxu0 0.0
    %296 = vmatpush1.msra.mxu0 %v113
    %297 = vmatprep.subr.mxu0 0.0
    %298 = vmatpush1.msra.mxu0 %v114
    %299 = vmatprep.subr.mxu0 0.0
    %300 = vmatpush1.msra.mxu0 %v115
    %301 = vmatprep.subr.mxu0 0.0
    %302 = vmatpush1.msra.mxu0 %v116
    %303 = vmatprep.subr.mxu0 0.0
    %304 = vmatpush1.msra.mxu0 %v117
    %305 = vmatprep.subr.mxu0 0.0
    %306 = vmatpush1.msra.mxu0 %v118
    %307 = vmatprep.subr.mxu0 0.0
    %308 = vmatpush1.msra.mxu0 %v119
    %309 = vmatprep.subr.mxu0 0.0
    %310 = vmatpush1.msra.mxu0 %v120
    %311 = vmatprep.subr.mxu0 0.0
    %312 = vmatpush1.msra.mxu0 %v121
    %313 = vmatprep.subr.mxu0 0.0
    %314 = vmatpush1.msra.mxu0 %v122
    %315 = vmatprep.subr.mxu0 0.0
    %316 = vmatpush1.msra.mxu0 %v123
    %317 = vmatprep.subr.mxu0 0.0
    %318 = vmatpush1.msra.mxu0 %v124
    %319 = vmatprep.subr.mxu0 0.0
    %320 = vmatpush1.msra.mxu0 %v125
    %321 = vmatprep.subr.mxu0 0.0
    %322 = vmatpush1.msra.mxu0 %v126
    %323 = vmatprep.subr.mxu0 0.0
    %324 = vmatpush1.msra.mxu0 %v127
    %325 = vmatprep.subr.mxu0 0.0
    %326 = vmatpush1.msra.mxu0 %v128
    %327 = vmatprep.subr.mxu0 0.0
    %328 = vmatpush1.msra.mxu0 %v129
    %329 = vmatprep.subr.mxu0 0.0
    %330 = vmatpush1.msra.mxu0 %v130
    %331 = vmatprep.subr.mxu0 0.0
    %332 = vmatpush1.msra.mxu0 %v131
    %333 = vmatprep.subr.mxu0 0.0
    %334 = vmatpush1.msra.mxu0 %v132
    %335 = vmatprep.subr.mxu0 0.0
    %336 = vmatpush1.msra.mxu0 %v133
    %337 = vmatprep.subr.mxu0 0.0
    %338 = vmatpush1.msra.mxu0 %v134
    %339 = vmatprep.subr.mxu0 0.0
    %340 = vmatpush1.msra.mxu0 %v135
    %341 = vmatprep.subr.mxu0 0.0
    %342 = vmatpush1.msra.mxu0 %v136
    %343 = vmatprep.subr.mxu0 0.0
    %344 = vmatpush1.msra.mxu0 %v137
    %345 = vmatprep.subr.mxu0 0.0
    %346 = vmatpush1.msra.mxu0 %v138
    %347 = vmatprep.subr.mxu0 0.0
    %348 = vmatpush1.msra.mxu0 %v139
    %349 = vmatprep.subr.mxu0 0.0
    %350 = vmatpush1.msra.mxu0 %v140
    %351 = vmatprep.mubr.f32.mxu0 %v43
    %352 = vmatmul.mubr.f32.gmra.mrb[0].mxu0 %v42
    %v353 = vpop.f32.mrb[0].mxu0
    %v354 = vadd.f32 %v284, %v353
    %v355 = vpop.f32.mrb[0].mxu0
    %356 = vdwg.mxu0
    %357 = vmatprep.subr.mxu0 0.0
    %358 = vmatpush1.msra.mxu0 %v141
    %359 = vmatprep.subr.mxu0 0.0
    %360 = vmatpush1.msra.mxu0 %v142
    %361 = vmatprep.subr.mxu0 0.0
    %362 = vmatpush1.msra.mxu0 0.0
    %363 = vmatprep.subr.mxu0 0.0
    %364 = vmatpush1.msra.mxu0 0.0
    %365 = vmatprep.subr.mxu0 0.0
    %366 = vmatpush1.msra.mxu0 0.0
    %367 = vmatprep.subr.mxu0 0.0
    %368 = vmatpush1.msra.mxu0 0.0
    %369 = vmatprep.subr.mxu0 0.0
    %370 = vmatpush1.msra.mxu0 0.0
    %371 = vmatprep.subr.mxu0 0.0
    %372 = vmatpush1.msra.mxu0 0.0
    %373 = vmatprep.subr.mxu0 0.0
    %374 = vmatpush1.msra.mxu0 0.0
    %375 = vmatprep.subr.mxu0 0.0
    %376 = vmatpush1.msra.mxu0 0.0
    %377 = vmatprep.subr.mxu0 0.0
    %378 = vmatpush1.msra.mxu0 0.0
    %379 = vmatprep.subr.mxu0 0.0
    %380 = vmatpush1.msra.mxu0 0.0
    %381 = vmatprep.subr.mxu0 0.0
    %382 = vmatpush1.msra.mxu0 0.0
    %383 = vmatprep.subr.mxu0 0.0
    %384 = vmatpush1.msra.mxu0 0.0
    %385 = vmatprep.subr.mxu0 0.0
    %386 = vmatpush1.msra.mxu0 0.0
    %387 = vmatprep.subr.mxu0 0.0
    %388 = vmatpush1.msra.mxu0 0.0
    %389 = vmatprep.subr.mxu0 0.0
    %390 = vmatpush1.msra.mxu0 0.0
    %391 = vmatprep.subr.mxu0 0.0
    %392 = vmatpush1.msra.mxu0 0.0
    %393 = vmatprep.subr.mxu0 0.0
    %394 = vmatpush1.msra.mxu0 0.0
    %395 = vmatprep.subr.mxu0 0.0
    %396 = vmatpush1.msra.mxu0 0.0
    %397 = vmatprep.subr.mxu0 0.0
    %398 = vmatpush1.msra.mxu0 0.0
    %399 = vmatprep.subr.mxu0 0.0
    %400 = vmatpush1.msra.mxu0 0.0
    %401 = vmatprep.subr.mxu0 0.0
    %402 = vmatpush1.msra.mxu0 0.0
    %403 = vmatprep.subr.mxu0 0.0
    %404 = vmatpush1.msra.mxu0 0.0
    %405 = vmatprep.subr.mxu0 0.0
    %406 = vmatpush1.msra.mxu0 0.0
    %407 = vmatprep.subr.mxu0 0.0
    %408 = vmatpush1.msra.mxu0 0.0
    %409 = vmatprep.subr.mxu0 0.0
    %410 = vmatpush1.msra.mxu0 0.0
    %411 = vmatprep.subr.mxu0 0.0
    %412 = vmatpush1.msra.mxu0 0.0
    %413 = vmatprep.subr.mxu0 0.0
    %414 = vmatpush1.msra.mxu0 0.0
    %415 = vmatprep.subr.mxu0 0.0
    %416 = vmatpush1.msra.mxu0 0.0
    %417 = vmatprep.subr.mxu0 0.0
    %418 = vmatpush1.msra.mxu0 0.0
    %419 = vmatprep.subr.mxu0 0.0
    %420 = vmatpush1.msra.mxu0 0.0
    %421 = vmatprep.mubr.f32.mxu0 0.0
    %422 = vmatmul.mubr.f32.gmra.mrb[0].mxu0 %v145
    %v423 = vpop.f32.mrb[0].mxu0
    %v424 = vadd.f32 %v354, %v423
    %v425 = vpop.f32.mrb[0].mxu0
    %426 = vdwg.mxu0
    %v427 = vlaneseq
    %v428 = vand.u32 %v427, 127
    %vm429 = vcmp.lt.s32.totalorder %v428, 10
    %v430 = vsel %vm429, %v424, -1e+30
    %431 = vmax.xlane.f32.xlu0 %v430
    %v432 = vpop.xlane.xlu0 %431
    %v433 = vsub.f32 %v430, %v432
    %v434 = vmul.f32 %v433, 1.442695
    %v435 = vpow.pop %v434
    %436 = vadd.xlane.f32.xlu0 %v435
    %v437 = vpop.xlane.xlu0 %436
    %v438 = vlog2.pop %v437
    %v439 = vmul.f32 %v438, 0.6931472
    %v440 = vsub.f32 %v433, %v439
    %441 = vst [vmem:[#allocation7] sm:$0xff] %v440
    // Predicated region
    $region18: #{tpu_custom_call.1} parent=1 // pred_check
      _
    $region19: #{tpu_custom_call.1} parent=1 // pred_check_branch
      %443 = sbr.rel (0) target = $region21
    $region20: #{tpu_custom_call.1} parent=1 // pred_region
      %s445 = ssub.s32 128, 128
      %446 = vsyncadd [#allocation4], %s445
      %s448 = sshll.u32 [#allocation7], 4
      %s449 = int_to_ptr.vmem [resolvable:$true] %s448
      %451 = dma.vmem_to_hbm [thread:$0]  %s449, 128, %s2, [#allocation4]
    $region21: #{tpu_custom_call.1} parent=1 // pred_fallthru
      _
    // Predicated region
    $region22: #{tpu_custom_call.1} parent=1 // pred_check
      _
    $region23: #{tpu_custom_call.1} parent=1 // pred_check_branch
      %453 = sbr.rel (0) target = $region25
    $region24: #{tpu_custom_call.1} parent=1 // pred_region
      %454 = dma.done [#allocation4], 128
    $region25: #{tpu_custom_call.1} parent=1 // pred_fallthru
      _
    %455 = vsyncpa [#allocation3], 1
    %456 = vsyncpa [#allocation6], 1
    %457 = vsyncpa [#allocation4], 1

</llo_original>
